<compile_context>
chip_gen: v7x
topology: tpu7x:2x2x1
jax: 0.10.0
libtpu: 0.0.40
codegen_flags: <defaults>
</compile_context>

<pallas_src>
import jax
import jax.numpy as jnp
from jax.experimental import pallas as pl
from jax.experimental.pallas import tpu as pltpu


_MAX_TILE_N = 2048  # objects per grid step; tiny VMEM footprint even on v7x


def _round_up(x, m):
    return (x + m - 1) // m * m


def _tile_plan(n):
    """Pick a lane-dense (multiple-of-128) tile over the object axis."""
    if n <= _MAX_TILE_N:
        tile = _round_up(n, 128)
        return tile, tile
    tile = _MAX_TILE_N
    return tile, _round_up(n, tile)


def listener_attn_kernel(wt_ref, obj_ref, w1o_ref, w2_ref, b2_ref, out_ref):
    # wt_ref : (1, H, 1)   f32 VMEM  -- word term (embeds[b] @ W1_words + b1)
    # obj_ref: (1, 1, O, T) f32 VMEM -- object features, object axis on lanes
    # w1o_ref: (H, O)      f32 VMEM  -- object part of W1, transposed
    # w2_ref : (H, 1)      f32 VMEM  -- attention weights (column)
    # b2_ref : (1, 1)      f32 SMEM  -- attention bias (scalar)
    # out_ref: (1, 1, 1, T) f32 VMEM -- attention scores for this tile
    obj = obj_ref[0, 0]                                         # (O, T)
    h = jnp.dot(w1o_ref[...], obj,
                preferred_element_type=jnp.float32)             # MXU: (H, T)
    h = jax.nn.sigmoid(h + wt_ref[0])                           # + (H, 1) word term
    a = jnp.sum(h * w2_ref[...], axis=0, keepdims=True)         # VPU mul + reduce -> (1, T)
    out_ref[0, 0] = jax.nn.sigmoid(a + b2_ref[0, 0])            # lane-dense store


def listener_forward(language_input, objects, params):
    emb = params["embedding"]        # (V, E)
    w1 = params["att_hidden_w"]      # (E+O, H)  stored transposed: (in, out)
    b1 = params["att_hidden_b"]      # (1, H)
    w2 = params["attention_w"]       # (H, 1)
    b2 = params["attention_b"]       # (1, 1)

    B, N, O = objects.shape
    E = emb.shape[1]
    H = w1.shape[1]

    tile_n, n_pad = _tile_plan(N)
    n_tiles = n_pad // tile_n

    # --- glue (plain XLA, all tiny): split W1, fold word embedding into a bias.
    w1_words = w1[:E, :]                                        # (E, H)
    w1_obj_t = jnp.transpose(w1[E:, :])                         # (H, O)
    embeds = jnp.take(emb, language_input, axis=0)              # (B, E)
    word_term = embeds.astype(jnp.float32) @ w1_words + b1      # (B, H)
    word_term = word_term[:, :, None]                           # (B, H, 1)

    # --- objects: pad the object axis to the tile grid and put it on lanes.
    obj = objects.astype(jnp.float32)
    if n_pad != N:
        obj = jnp.pad(obj, ((0, 0), (0, n_pad - N), (0, 0)))
    obj_t = obj.reshape(B, n_tiles, tile_n, O).transpose(0, 1, 3, 2)  # (B, nt, O, T)

    out = pl.pallas_call(
        listener_attn_kernel,
        out_shape=jax.ShapeDtypeStruct((B, n_tiles, 1, tile_n), jnp.float32),
        grid_spec=pl.GridSpec(
            grid=(B, n_tiles),
            in_specs=[
                pl.BlockSpec((1, H, 1), lambda b, j: (b, 0, 0)),          # word term
                pl.BlockSpec((1, 1, O, tile_n), lambda b, j: (b, j, 0, 0)),  # objects
                pl.BlockSpec((H, O), lambda b, j: (0, 0)),                # W1_obj^T
                pl.BlockSpec((H, 1), lambda b, j: (0, 0)),                # W2
                pl.BlockSpec(memory_space=pltpu.MemorySpace.SMEM),        # b2 scalar
            ],
            out_specs=pl.BlockSpec((1, 1, 1, tile_n), lambda b, j: (b, j, 0, 0)),
        ),
        compiler_params=pltpu.CompilerParams(
            dimension_semantics=("parallel", "parallel")),
    )(word_term, obj_t, w1_obj_t,
      w2.astype(jnp.float32), b2.astype(jnp.float32))

    return out.reshape(B, n_pad)[:, :N]


def init_params(key, object_size, vocab_size, wordemb_size, att_hidden_size):
    k_emb, k_w1, k_w2 = jax.random.split(key, 3)

    # nn.init.xavier_uniform_(embedding.weight, gain=1)
    bound = (6.0 / (vocab_size + wordemb_size)) ** 0.5
    embedding = jax.random.uniform(
        k_emb, (vocab_size, wordemb_size),
        minval=-bound, maxval=bound, dtype=jnp.float32)

    # nn.init.kaiming_normal_(weight, mode='fan_in', nonlinearity='sigmoid')
    # gain(sigmoid)=1 -> std = 1/sqrt(fan_in).  Stored transposed: (in, out).
    fan1 = wordemb_size + object_size
    att_hidden_w = (jax.random.normal(k_w1, (fan1, att_hidden_size),
                                      dtype=jnp.float32) / jnp.sqrt(fan1))
    att_hidden_b = jnp.zeros((1, att_hidden_size), jnp.float32)

    fan2 = att_hidden_size
    attention_w = (jax.random.normal(k_w2, (fan2, 1),
                                     dtype=jnp.float32) / jnp.sqrt(fan2))
    attention_b = jnp.zeros((1, 1), jnp.float32)

    return dict(embedding=embedding,
                att_hidden_w=att_hidden_w, att_hidden_b=att_hidden_b,
                attention_w=attention_w, attention_b=attention_b)


if __name__ == "__main__":
    # Small shapes consistent with the module's forward.
    B, N = 2, 4
    object_size, vocab_size = 8, 10
    wordemb_size, att_hidden_size = 16, 32

    key = jax.random.PRNGKey(0)
    k_params, k_lang, k_obj = jax.random.split(key, 3)

    params = init_params(k_params, object_size, vocab_size,
                         wordemb_size, att_hidden_size)

    language_input = jax.random.randint(k_lang, (B,), 0, vocab_size)      # (B,)
    objects = jax.random.normal(k_obj, (B, N, object_size),
                                dtype=jnp.float32)                        # (B, N, O)

    attended = listener_forward(language_input, objects, params)
    attended = jax.block_until_ready(attended)

    # Pure-JAX reference check (same math as the torch module, no Pallas).
    embeds = jnp.take(params["embedding"], language_input, axis=0)
    words = jnp.broadcast_to(embeds[:, None, :], (B, N, wordemb_size))
    concat = jnp.concatenate([words, objects], axis=-1).reshape(B * N, -1)
    h_ref = jax.nn.sigmoid(concat @ params["att_hidden_w"] + params["att_hidden_b"])
    ref = jax.nn.sigmoid(h_ref @ params["attention_w"] + params["attention_b"])
    ref = ref.reshape(B, N)

    assert attended.shape == (B, N)
    assert jnp.allclose(attended, ref, atol=1e-4, rtol=1e-4)
    print("KERNEL_OK")
</pallas_src>

<mosaic_0001>
module attributes {stable_mosaic.version = 11 : i64} {
  func.func @listener_attn_kernel(%arg0: i32, %arg1: i32, %arg2: memref<1x32x1xf32, #tpu.memory_space<vmem>>, %arg3: memref<1x1x8x128xf32, #tpu.memory_space<vmem>>, %arg4: memref<32x8xf32, #tpu.memory_space<vmem>>, %arg5: memref<32x1xf32, #tpu.memory_space<vmem>>, %arg6: memref<1x1xf32, #tpu.memory_space<smem>>, %arg7: memref<1x1x1x128xf32, #tpu.memory_space<vmem>>) attributes {dimension_semantics = [#tpu.dimension_semantics<parallel>, #tpu.dimension_semantics<parallel>], iteration_bounds = array<i64: 2, 1>, scalar_prefetch = 0 : i64, scratch_operands = 0 : i64, tpu.core_type = #tpu.core_type<tc>, window_params = [{transform_indices = @transform_0, window_bounds = array<i64: 1, 32, 1>}, {transform_indices = @transform_1, window_bounds = array<i64: 1, 1, 8, 128>}, {pipeline_mode = #tpu.pipeline_mode<synchronous>, transform_indices = @transform_2, window_bounds = array<i64: 32, 8>}, {pipeline_mode = #tpu.pipeline_mode<synchronous>, transform_indices = @transform_3, window_bounds = array<i64: 32, 1>}, {transform_indices = @transform_4, window_bounds = array<i64: 1, 1>}, {transform_indices = @transform_5, window_bounds = array<i64: 1, 1, 1, 128>}]} {
    %c0 = arith.constant 0 : index
    %c0_0 = arith.constant 0 : index
    %c0_1 = arith.constant 0 : index
    %c0_2 = arith.constant 0 : index
    %0 = vector.load %arg3[%c0, %c0_0, %c0_1, %c0_2] : memref<1x1x8x128xf32, #tpu.memory_space<vmem>>, vector<1x1x8x128xf32>
    %1 = vector.shape_cast %0 : vector<1x1x8x128xf32> to vector<8x128xf32>
    %c0_3 = arith.constant 0 : index
    %c0_4 = arith.constant 0 : index
    %2 = vector.load %arg4[%c0_3, %c0_4] : memref<32x8xf32, #tpu.memory_space<vmem>>, vector<32x8xf32>
    %cst = arith.constant dense<0.000000e+00> : vector<32x128xf32>
    %3 = tpu.matmul %2, %1, %cst {dimension_numbers = #tpu.dot_dimension_numbers<[1], [0], [0], [1], [0, 0, 1, 1], [], []>} : vector<32x8xf32>, vector<8x128xf32>, vector<32x128xf32> -> vector<32x128xf32>
    %c0_5 = arith.constant 0 : index
    %c0_6 = arith.constant 0 : index
    %c0_7 = arith.constant 0 : index
    %4 = vector.load %arg2[%c0_5, %c0_6, %c0_7] : memref<1x32x1xf32, #tpu.memory_space<vmem>>, vector<1x32x1xf32>
    %5 = vector.shape_cast %4 : vector<1x32x1xf32> to vector<32x1xf32>
    %6 = vector.broadcast %5 : vector<32x1xf32> to vector<32x128xf32>
    %7 = arith.addf %3, %6 : vector<32x128xf32>
    %8 = arith.negf %7 : vector<32x128xf32>
    %9 = math.exp %8 : vector<32x128xf32>
    %cst_8 = arith.constant 1.000000e+00 : f32
    %10 = vector.broadcast %cst_8 : f32 to vector<32x128xf32>
    %11 = arith.addf %10, %9 : vector<32x128xf32>
    %12 = arith.divf %10, %11 : vector<32x128xf32>
    %c0_9 = arith.constant 0 : index
    %c0_10 = arith.constant 0 : index
    %13 = vector.load %arg5[%c0_9, %c0_10] : memref<32x1xf32, #tpu.memory_space<vmem>>, vector<32x1xf32>
    %14 = vector.broadcast %13 : vector<32x1xf32> to vector<32x128xf32>
    %15 = arith.mulf %12, %14 : vector<32x128xf32>
    %cst_11 = arith.constant dense<0.000000e+00> : vector<128xf32>
    %16 = vector.multi_reduction <add>, %15, %cst_11 [0] : vector<32x128xf32> to vector<128xf32>
    %17 = vector.shape_cast %16 : vector<128xf32> to vector<1x128xf32>
    %c0_12 = arith.constant 0 : index
    %c0_13 = arith.constant 0 : index
    %18 = memref.load %arg6[%c0_12, %c0_13] : memref<1x1xf32, #tpu.memory_space<smem>>
    %19 = vector.broadcast %18 : f32 to vector<1x128xf32>
    %20 = arith.addf %17, %19 : vector<1x128xf32>
    %21 = arith.negf %20 : vector<1x128xf32>
    %22 = math.exp %21 : vector<1x128xf32>
    %cst_14 = arith.constant 1.000000e+00 : f32
    %23 = vector.broadcast %cst_14 : f32 to vector<1x128xf32>
    %24 = arith.addf %23, %22 : vector<1x128xf32>
    %25 = arith.divf %23, %24 : vector<1x128xf32>
    %c0_15 = arith.constant 0 : index
    %c0_16 = arith.constant 0 : index
    %c0_17 = arith.constant 0 : index
    %c0_18 = arith.constant 0 : index
    %26 = vector.load %arg7[%c0_15, %c0_16, %c0_17, %c0_18] : memref<1x1x1x128xf32, #tpu.memory_space<vmem>>, vector<1x1x1x128xf32>
    %27 = vector.shape_cast %26 : vector<1x1x1x128xf32> to vector<1x128xf32>
    %28 = vector.shape_cast %25 : vector<1x128xf32> to vector<1x1x1x128xf32>
    tpu.vector_store %arg7[%c0_15, %c0_16, %c0_17, %c0_18], %28 {strides = array<i32>} : memref<1x1x1x128xf32, #tpu.memory_space<vmem>>, vector<1x1x1x128xf32>,
    return
  }
  func.func @transform_0(%arg0: i32, %arg1: i32) -> (i32, i32, i32) {
    %c0_i32 = arith.constant 0 : i32
    %c0_i32_0 = arith.constant 0 : i32
    %c0_i32_1 = arith.constant 0 : i32
    return %arg0, %c0_i32, %c0_i32_0 : i32, i32, i32
  }
  func.func @transform_1(%arg0: i32, %arg1: i32) -> (i32, i32, i32, i32) {
    %c0_i32 = arith.constant 0 : i32
    %c0_i32_0 = arith.constant 0 : i32
    %c0_i32_1 = arith.constant 0 : i32
    return %arg0, %arg1, %c0_i32, %c0_i32_0 : i32, i32, i32, i32
  }
  func.func @transform_2(%arg0: i32, %arg1: i32) -> (i32, i32) {
    %c0_i32 = arith.constant 0 : i32
    %c0_i32_0 = arith.constant 0 : i32
    %c0_i32_1 = arith.constant 0 : i32
    return %c0_i32, %c0_i32_0 : i32, i32
  }
  func.func @transform_3(%arg0: i32, %arg1: i32) -> (i32, i32) {
    %c0_i32 = arith.constant 0 : i32
    %c0_i32_0 = arith.constant 0 : i32
    %c0_i32_1 = arith.constant 0 : i32
    return %c0_i32, %c0_i32_0 : i32, i32
  }
  func.func @transform_4(%arg0: i32, %arg1: i32) -> (i32, i32) {
    %c0_i32 = arith.constant 0 : i32
    %c0_i32_0 = arith.constant 0 : i32
    %c0_i32_1 = arith.constant 0 : i32
    return %c0_i32, %c0_i32_0 : i32, i32
  }
  func.func @transform_5(%arg0: i32, %arg1: i32) -> (i32, i32, i32, i32) {
    %c0_i32 = arith.constant 0 : i32
    %c0_i32_0 = arith.constant 0 : i32
    %c0_i32_1 = arith.constant 0 : i32
    return %arg0, %arg1, %c0_i32, %c0_i32_0 : i32, i32, i32, i32
  }
}

</mosaic_0001>

<llo_original>
// kernel: tpu_custom_call.1
$region0: #{tpu_custom_call.1}
  #allocation0 [shape = 'u32[]', space=smem, size = 0x4, offset = 0x4, fixed_abs, tag = 'smem constant byte address 0x4 - core index']
  #allocation1 [shape = 'u32[144,128]{1,0:T(1,128)}', space=vmem, size = 0x12000, scoped, tag = 'internal scratch']
  #allocation2 [shape = 'f32[1,1]{1,0:T(1,128)S(6)}', space=smem, size = 0x200, scoped, tag = 'scoped memory for tpu_custom_call.1']
  %s0 = inlined_call_operand.vmem [shape: f32[2,32,1], index: 0, kind: input, shape index: {}]
  %s1 = inlined_call_operand.vmem [shape: f32[2,1,8,128], index: 1, kind: input, shape index: {}]
  %s2 = inlined_call_operand.vmem [shape: f32[32,8], index: 2, kind: input, shape index: {}]
  %s3 = inlined_call_operand.vmem [shape: f32[32,1], index: 3, kind: input, shape index: {}]
  %s4 = inlined_call_operand.<no memory space> [shape: f32[1,1], index: 4, kind: input, shape index: {}]
  %s5 = inlined_call_operand.hbm [shape: f32[2,1,1,128], index: 5, kind: output, shape index: {}]
  %s6 = sld [smem:[#allocation0]]
  $region53: #{tpu_custom_call.1} parent=0
    _
  %s8 = ssub.s32 1, %s6
  %s9 = scalar_select 0, %s8, %s6
  %10 = sst [smem:[#allocation2]] %s4
  $region1: #{tpu_custom_call.1} parent=0
    #allocation3 [shape = 'u8[1024]{0}', space=vmem, size = 0x400, scoped, tag = 'output window, operand 0']
    #allocation4 [shape = 's32[2]{0}', space=sflag, size = 0x8, scoped, tag = 'scoped memory for tpu_custom_call.1']
    %11 = vsyncpa [#allocation4], 0
    %s12 = scalar_lea.sflag [#allocation4], 1
    %13 = vsyncpa %s12, 0
    loop: start=0, step=1, limit=4
    $region2: #{tpu_custom_call.1} parent=1 // loop_pre_header
      _
    $region3: #{tpu_custom_call.1} parent=1 // loop_header
      %s15 = sphi 0, %s19
      %p16 = scmp.ge.s32.totalorder %s15, 4
      %s22 = sphi 0, %s34
      %s23 = sphi 0, %s30
      %s24 = sphi 0, %s22
      %s25 = sphi 0, %s23
      %s26 = sphi 0, %s24
      %s27 = sphi 0, %s25
      %s37 = sphi 0, %s39
      %s40 = sphi 0, %s37
      %s41 = sphi 0, %s40
      %s57 = sphi 0, %s41
      %s65 = sphi 0, %s67
      %s68 = sphi 0, %s65
      %s69 = sphi 0, %s68
      %s85 = sphi 0, %s69
      %s89 = sphi 0, %s89
      %s91 = sphi 0, %s89
      %s92 = sphi 0, %s91
      %s106 = sphi 0, %s92
      %s110 = sphi 0, %s110
      %s112 = sphi 0, %s110
      %s113 = sphi 0, %s112
      %s127 = sphi 0, %s113
      %s131 = sphi 0, %s131
      %s133 = sphi 0, %s131
      %s134 = sphi 0, %s133
      %s148 = sphi 0, %s134
      %s156 = sphi 0, %s158
      %s159 = sphi 0, %s156
      %s160 = sphi 0, %s159
      %s176 = sphi 0, %s160
    $region4: #{tpu_custom_call.1} parent=1 // loop_header_branch
      %18 = sbr.rel (%p16) target = $region8
    $region5: #{tpu_custom_call.1} parent=1 // loop_body
      %s20 = ssub.s32 %s15, 1
      %s21 = ssub.s32 %s15, 2
      %s28 = sadd.s32 1, %s23
      %p29 = scmp.ge.s32.totalorder %s28, 1
      %s30 = scalar_select %p29, 0, %s28
      %s31 = sadd.s32 1, %s22
      %s32 = scalar_select %p29, %s31, %s22
      %p33 = scmp.ge.s32.totalorder %s32, 2
      %s34 = scalar_select %p33, 0, %s32
      %s35 = ssub.s32 %s22, %s34
      %p36 = scmp.eq.s32.totalorder %s35, 0
      %s38 = sadd.s32 %s37, 1
      %s39 = scalar_select %p36, %s37, %s38
      %p42 = pneg %p36
      %p43 = scmp.eq.s32.totalorder %s15, 1
      %p44 = por %p42, %p43
      %p45 = scmp.ne.s32.totalorder %s37, %s40
      %p46 = scmp.eq.s32.totalorder %s15, 0
      %p47 = por %p45, %p46
      %p48 = scmp.ne.s32.totalorder %s37, %s40
      %p49 = scmp.eq.s32.totalorder %s20, 1
      %p50 = por %p48, %p49
      %p51 = scmp.ne.s32.totalorder %s40, %s41
      %p52 = scmp.eq.s32.totalorder %s20, 0
      %p53 = por %p51, %p52
      %p54 = scmp.ne.s32.totalorder %s40, %s41
      %p55 = scmp.eq.s32.totalorder %s21, 1
      %p56 = por %p54, %p55
      %p58 = scmp.ne.s32.totalorder %s41, %s57
      %p59 = scmp.eq.s32.totalorder %s21, 0
      %p60 = por %p58, %p59
      %s61 = ssub.s32 %s22, %s34
      %s62 = ssub.s32 %s23, %s30
      %s63 = sor.u32 %s61, %s62
      %p64 = scmp.eq.s32.totalorder %s63, 0
      %s66 = sadd.s32 %s65, 1
      %s67 = scalar_select %p64, %s65, %s66
      %p70 = pneg %p64
      %p71 = scmp.eq.s32.totalorder %s15, 1
      %p72 = por %p70, %p71
      %p73 = scmp.ne.s32.totalorder %s65, %s68
      %p74 = scmp.eq.s32.totalorder %s15, 0
      %p75 = por %p73, %p74
      %p76 = scmp.ne.s32.totalorder %s65, %s68
      %p77 = scmp.eq.s32.totalorder %s20, 1
      %p78 = por %p76, %p77
      %p79 = scmp.ne.s32.totalorder %s68, %s69
      %p80 = scmp.eq.s32.totalorder %s20, 0
      %p81 = por %p79, %p80
      %p82 = scmp.ne.s32.totalorder %s68, %s69
      %p83 = scmp.eq.s32.totalorder %s21, 1
      %p84 = por %p82, %p83
      %p86 = scmp.ne.s32.totalorder %s69, %s85
      %p87 = scmp.eq.s32.totalorder %s21, 0
      %p88 = por %p86, %p87
      %s90 = sadd.s32 %s89, 1
      %p93 = scmp.eq.s32.totalorder %s15, 1
      %p94 = scmp.ne.s32.totalorder %s89, %s91
      %p95 = scmp.eq.s32.totalorder %s15, 0
      %p96 = por %p94, %p95
      %p97 = scmp.ne.s32.totalorder %s89, %s91
      %p98 = scmp.eq.s32.totalorder %s20, 1
      %p99 = por %p97, %p98
      %p100 = scmp.ne.s32.totalorder %s91, %s92
      %p101 = scmp.eq.s32.totalorder %s20, 0
      %p102 = por %p100, %p101
      %p103 = scmp.ne.s32.totalorder %s91, %s92
      %p104 = scmp.eq.s32.totalorder %s21, 1
      %p105 = por %p103, %p104
      %p107 = scmp.ne.s32.totalorder %s92, %s106
      %p108 = scmp.eq.s32.totalorder %s21, 0
      %p109 = por %p107, %p108
      %s111 = sadd.s32 %s110, 1
      %p114 = scmp.eq.s32.totalorder %s15, 1
      %p115 = scmp.ne.s32.totalorder %s110, %s112
      %p116 = scmp.eq.s32.totalorder %s15, 0
      %p117 = por %p115, %p116
      %p118 = scmp.ne.s32.totalorder %s110, %s112
      %p119 = scmp.eq.s32.totalorder %s20, 1
      %p120 = por %p118, %p119
      %p121 = scmp.ne.s32.totalorder %s112, %s113
      %p122 = scmp.eq.s32.totalorder %s20, 0
      %p123 = por %p121, %p122
      %p124 = scmp.ne.s32.totalorder %s112, %s113
      %p125 = scmp.eq.s32.totalorder %s21, 1
      %p126 = por %p124, %p125
      %p128 = scmp.ne.s32.totalorder %s113, %s127
      %p129 = scmp.eq.s32.totalorder %s21, 0
      %p130 = por %p128, %p129
      %s132 = sadd.s32 %s131, 1
      %p135 = scmp.eq.s32.totalorder %s15, 1
      %p136 = scmp.ne.s32.totalorder %s131, %s133
      %p137 = scmp.eq.s32.totalorder %s15, 0
      %p138 = por %p136, %p137
      %p139 = scmp.ne.s32.totalorder %s131, %s133
      %p140 = scmp.eq.s32.totalorder %s20, 1
      %p141 = por %p139, %p140
      %p142 = scmp.ne.s32.totalorder %s133, %s134
      %p143 = scmp.eq.s32.totalorder %s20, 0
      %p144 = por %p142, %p143
      %p145 = scmp.ne.s32.totalorder %s133, %s134
      %p146 = scmp.eq.s32.totalorder %s21, 1
      %p147 = por %p145, %p146
      %p149 = scmp.ne.s32.totalorder %s134, %s148
      %p150 = scmp.eq.s32.totalorder %s21, 0
      %p151 = por %p149, %p150
      %s152 = ssub.s32 %s22, %s34
      %s153 = ssub.s32 %s23, %s30
      %s154 = sor.u32 %s152, %s153
      %p155 = scmp.eq.s32.totalorder %s154, 0
      %s157 = sadd.s32 %s156, 1
      %s158 = scalar_select %p155, %s156, %s157
      %p161 = pneg %p155
      %p162 = scmp.eq.s32.totalorder %s15, 1
      %p163 = por %p161, %p162
      %p164 = scmp.ne.s32.totalorder %s156, %s159
      %p165 = scmp.eq.s32.totalorder %s15, 0
      %p166 = por %p164, %p165
      %p167 = scmp.ne.s32.totalorder %s156, %s159
      %p168 = scmp.eq.s32.totalorder %s20, 1
      %p169 = por %p167, %p168
      %p170 = scmp.ne.s32.totalorder %s159, %s160
      %p171 = scmp.eq.s32.totalorder %s20, 0
      %p172 = por %p170, %p171
      %p173 = scmp.ne.s32.totalorder %s159, %s160
      %p174 = scmp.eq.s32.totalorder %s21, 1
      %p175 = por %p173, %p174
      %p177 = scmp.ne.s32.totalorder %s160, %s176
      %p178 = scmp.eq.s32.totalorder %s21, 0
      %p179 = por %p177, %p178
      %p180 = scmp.le.s32.totalorder 1, %s15
      %p181 = scmp.lt.s32.totalorder %s15, 3
      %p182 = pnand %p180, %p181
      %p183 = pneg %p182
      // Predicated region
      $region9: #{tpu_custom_call.1} parent=5 // pred_check
        _
      $region10: #{tpu_custom_call.1} parent=5 // pred_check_branch
        %185 = sbr.rel (%p182) target = $region12
      $region11: #{tpu_custom_call.1} parent=5 // pred_region
        %s186 = ssub.s32 %s15, 1
        // Predicated region
        $region13: #{tpu_custom_call.1} parent=11 // pred_check
          %p187 = pneg %p102
        $region14: #{tpu_custom_call.1} parent=11 // pred_check_branch
          %189 = sbr.rel (%p187) target = $region16
        $region15: #{tpu_custom_call.1} parent=11 // pred_region
          _
        $region16: #{tpu_custom_call.1} parent=11 // pred_fallthru
          _
        // Predicated region
        $region17: #{tpu_custom_call.1} parent=11 // pred_check
          %p190 = pneg %p123
        $region18: #{tpu_custom_call.1} parent=11 // pred_check_branch
          %192 = sbr.rel (%p190) target = $region20
        $region19: #{tpu_custom_call.1} parent=11 // pred_region
          _
        $region20: #{tpu_custom_call.1} parent=11 // pred_fallthru
          _
        // Predicated region
        $region21: #{tpu_custom_call.1} parent=11 // pred_check
          %p193 = pneg %p144
        $region22: #{tpu_custom_call.1} parent=11 // pred_check_branch
          %195 = sbr.rel (%p193) target = $region24
        $region23: #{tpu_custom_call.1} parent=11 // pred_region
          _
        $region24: #{tpu_custom_call.1} parent=11 // pred_fallthru
          _
      $region12: #{tpu_custom_call.1} parent=5 // pred_fallthru
        _
      %p196 = scmp.lt.s32.totalorder %s15, 2
      // Predicated region
      $region25: #{tpu_custom_call.1} parent=5 // pred_check
        %p197 = pneg %p196
      $region26: #{tpu_custom_call.1} parent=5 // pred_check_branch
        %199 = sbr.rel (%p197) target = $region28
      $region27: #{tpu_custom_call.1} parent=5 // pred_region
        // Predicated region
        $region29: #{tpu_custom_call.1} parent=27 // pred_check
          %p200 = pneg %p47
        $region30: #{tpu_custom_call.1} parent=27 // pred_check_branch
          %202 = sbr.rel (%p200) target = $region32
        $region31: #{tpu_custom_call.1} parent=27 // pred_region
          %p203 = scmp.lt.s32.totalorder %s22, 1
          %s204 = scalar_select %p203, %s22, 1
          %s205 = smul.addr %s204, 4
          %s206 = smul.addr %s205, 8
          %s207 = scalar_lea.vmem %s0, %s206
        $region32: #{tpu_custom_call.1} parent=27 // pred_fallthru
          _
        // Predicated region
        $region33: #{tpu_custom_call.1} parent=27 // pred_check
          %p208 = pneg %p75
        $region34: #{tpu_custom_call.1} parent=27 // pred_check_branch
          %210 = sbr.rel (%p208) target = $region36
        $region35: #{tpu_custom_call.1} parent=27 // pred_region
          %p211 = scmp.lt.s32.totalorder %s22, 1
          %s212 = scalar_select %p211, %s22, 1
          %p213 = scmp.lt.s32.totalorder %s23, 0
          %s214 = scalar_select %p213, %s23, 0
          %s215 = sadd.s32 %s214, %s212
          %s216 = smul.addr %s215, 8
          %s217 = scalar_lea.vmem %s1, %s216
        $region36: #{tpu_custom_call.1} parent=27 // pred_fallthru
          _
      $region28: #{tpu_custom_call.1} parent=5 // pred_fallthru
        _
      %p218 = scmp.le.s32.totalorder 1, %s15
      %p219 = scmp.lt.s32.totalorder %s15, 3
      %p220 = pnand %p218, %p219
      %p221 = pneg %p220
      // Predicated region
      $region37: #{tpu_custom_call.1} parent=5 // pred_check
        _
      $region38: #{tpu_custom_call.1} parent=5 // pred_check_branch
        %223 = sbr.rel (%p220) target = $region40
      $region39: #{tpu_custom_call.1} parent=5 // pred_region
        %s224 = ssub.s32 %s15, 1
        %p225 = scmp.lt.s32.totalorder %s24, 1
        %s226 = scalar_select %p225, %s24, 1
        %s227 = smul.addr %s226, 4
        %s228 = smul.addr %s227, 8
        %s229 = scalar_lea.vmem %s0, %s228
        %p230 = pneg %p53
        %p231 = pneg %p50
        %p232 = scmp.lt.s32.totalorder %s24, 1
        %s233 = scalar_select %p232, %s24, 1
        %p234 = scmp.lt.s32.totalorder %s25, 0
        %s235 = scalar_select %p234, %s25, 0
        %s236 = sadd.s32 %s235, %s233
        %s237 = smul.addr %s236, 8
        %s238 = scalar_lea.vmem %s1, %s237
        %p239 = pneg %p81
        %p240 = pneg %p78
        %p241 = pneg %p102
        %p242 = pneg %p99
        %p243 = pneg %p123
        %p244 = pneg %p120
        %p245 = pneg %p144
        %p246 = pneg %p141
        %p247 = pneg %p172
        %p248 = pneg %p169
        %s249 = sand.u32 %s159, 1
        %s250 = scalar_lea.sflag [#allocation4], %s249
        %s251 = sand.u32 %s159, 1
        %s252 = scalar_lea.vmem [#allocation3], %s251
        %p253 = scmp.lt.s32.totalorder %s24, 1
        %s254 = scalar_select %p253, %s24, 1
        %s255 = smul.addr %s254, 4
        %s256 = smul.addr %s255, 8
        %s257 = scalar_lea.vmem %s0, %s256
        %p258 = scmp.lt.s32.totalorder %s24, 1
        %s259 = scalar_select %p258, %s24, 1
        %p260 = scmp.lt.s32.totalorder %s25, 0
        %s261 = scalar_select %p260, %s25, 0
        %s262 = sadd.s32 %s261, %s259
        %s263 = smul.addr %s262, 8
        %s264 = scalar_lea.vmem %s1, %s263
        %v265 = vld [vmem:[%s264] sm:$0xff]
        %v266 = vld [vmem:[%s2] sm:$0xff]
        %v267 = vld [vmem:[%s2 + $0x8] sm:$0xff]
        %v268 = vld [vmem:[%s2 + $0x10] sm:$0xff]
        %v269 = vld [vmem:[%s2 + $0x18] sm:$0xff]
        %v270 = vld [vmem:[%s257] sm:$0xff]
        %v271 = vld [vmem:[%s257 + $0x8] sm:$0xff]
        %v272 = vld [vmem:[%s257 + $0x10] sm:$0xff]
        %v273 = vld [vmem:[%s257 + $0x18] sm:$0xff]
        %275 = vset.pattern.permute.xlu0 0
        %276 = vperm.xlu0 %275, %v270
        %v277 = vpop.permute.xlu0 %276
        %280 = vset.pattern.permute.xlu0 0
        %281 = vperm.xlu0 %280, %v271
        %v282 = vpop.permute.xlu0 %281
        %285 = vset.pattern.permute.xlu0 0
        %286 = vperm.xlu0 %285, %v272
        %v287 = vpop.permute.xlu0 %286
        %290 = vset.pattern.permute.xlu0 0
        %291 = vperm.xlu0 %290, %v273
        %v292 = vpop.permute.xlu0 %291
        %vm294 = vcmask 64512
        %v296 = vsel %vm294, %v266, 0
        %v299 = vsel %vm294, %v267, 0
        %v302 = vsel %vm294, %v268, 0
        %v305 = vsel %vm294, %v269, 0
        %307 = vmatprep.subr.mxu0 0.0
        %308 = vmatpush1.msra.mxu0 %v265
        %309 = vmatprep.subr.mxu0 0.0
        %310 = vmatpush1.msra.mxu0 0.0
        %311 = vmatprep.subr.mxu0 0.0
        %312 = vmatpush1.msra.mxu0 0.0
        %313 = vmatprep.subr.mxu0 0.0
        %314 = vmatpush1.msra.mxu0 0.0
        %315 = vmatprep.subr.mxu0 0.0
        %316 = vmatpush1.msra.mxu0 0.0
        %317 = vmatprep.subr.mxu0 0.0
        %318 = vmatpush1.msra.mxu0 0.0
        %319 = vmatprep.subr.mxu0 0.0
        %320 = vmatpush1.msra.mxu0 0.0
        %321 = vmatprep.subr.mxu0 0.0
        %322 = vmatpush1.msra.mxu0 0.0
        %323 = vmatprep.subr.mxu0 0.0
        %324 = vmatpush1.msra.mxu0 0.0
        %325 = vmatprep.subr.mxu0 0.0
        %326 = vmatpush1.msra.mxu0 0.0
        %327 = vmatprep.subr.mxu0 0.0
        %328 = vmatpush1.msra.mxu0 0.0
        %329 = vmatprep.subr.mxu0 0.0
        %330 = vmatpush1.msra.mxu0 0.0
        %331 = vmatprep.subr.mxu0 0.0
        %332 = vmatpush1.msra.mxu0 0.0
        %333 = vmatprep.subr.mxu0 0.0
        %334 = vmatpush1.msra.mxu0 0.0
        %335 = vmatprep.subr.mxu0 0.0
        %336 = vmatpush1.msra.mxu0 0.0
        %337 = vmatprep.subr.mxu0 0.0
        %338 = vmatpush1.msra.mxu0 0.0
        %339 = vmatprep.subr.mxu0 0.0
        %340 = vmatpush1.msra.mxu0 0.0
        %341 = vmatprep.subr.mxu0 0.0
        %342 = vmatpush1.msra.mxu0 0.0
        %343 = vmatprep.subr.mxu0 0.0
        %344 = vmatpush1.msra.mxu0 0.0
        %345 = vmatprep.subr.mxu0 0.0
        %346 = vmatpush1.msra.mxu0 0.0
        %347 = vmatprep.subr.mxu0 0.0
        %348 = vmatpush1.msra.mxu0 0.0
        %349 = vmatprep.subr.mxu0 0.0
        %350 = vmatpush1.msra.mxu0 0.0
        %351 = vmatprep.subr.mxu0 0.0
        %352 = vmatpush1.msra.mxu0 0.0
        %353 = vmatprep.subr.mxu0 0.0
        %354 = vmatpush1.msra.mxu0 0.0
        %355 = vmatprep.subr.mxu0 0.0
        %356 = vmatpush1.msra.mxu0 0.0
        %357 = vmatprep.subr.mxu0 0.0
        %358 = vmatpush1.msra.mxu0 0.0
        %359 = vmatprep.subr.mxu0 0.0
        %360 = vmatpush1.msra.mxu0 0.0
        %361 = vmatprep.subr.mxu0 0.0
        %362 = vmatpush1.msra.mxu0 0.0
        %363 = vmatprep.subr.mxu0 0.0
        %364 = vmatpush1.msra.mxu0 0.0
        %365 = vmatprep.subr.mxu0 0.0
        %366 = vmatpush1.msra.mxu0 0.0
        %367 = vmatprep.subr.mxu0 0.0
        %368 = vmatpush1.msra.mxu0 0.0
        %369 = vmatprep.subr.mxu0 0.0
        %370 = vmatpush1.msra.mxu0 0.0
        %371 = vmatprep.mubr.f32.mxu0 0.0
        %372 = vmatmul.mubr.f32.gmra.mrb[0].mxu0 %v296
        %v373 = vpop.f32.mrb[0].mxu0
        %v374 = vadd.f32 %v277, %v373
        %v375 = vpop.f32.mrb[0].mxu0
        %376 = vmatprep.mubr.f32.mxu0 0.0
        %377 = vmatmul.mubr.f32.gmra.mrb[0].mxu0 %v299
        %v378 = vpop.f32.mrb[0].mxu0
        %v379 = vadd.f32 %v282, %v378
        %v380 = vpop.f32.mrb[0].mxu0
        %381 = vmatprep.mubr.f32.mxu0 0.0
        %382 = vmatmul.mubr.f32.gmra.mrb[0].mxu0 %v302
        %v383 = vpop.f32.mrb[0].mxu0
        %v384 = vadd.f32 %v287, %v383
        %v385 = vpop.f32.mrb[0].mxu0
        %386 = vmatprep.mubr.f32.mxu0 0.0
        %387 = vmatmul.mubr.f32.gmra.mrb[0].mxu0 %v305
        %v388 = vpop.f32.mrb[0].mxu0
        %v389 = vadd.f32 %v292, %v388
        %v390 = vpop.f32.mrb[0].mxu0
        %391 = vdwg.mxu0
        %v392 = vxor.u32 %v374, 2147483648
        %v393 = vxor.u32 %v379, 2147483648
        %v394 = vxor.u32 %v384, 2147483648
        %v395 = vxor.u32 %v389, 2147483648
        %v396 = vmul.f32 %v392, 1.442695
        %v397 = vpow.pop %v396
        %v398 = vmul.f32 %v393, 1.442695
        %v399 = vpow.pop %v398
        %v400 = vmul.f32 %v394, 1.442695
        %v401 = vpow.pop %v400
        %v402 = vmul.f32 %v395, 1.442695
        %v403 = vpow.pop %v402
        %v404 = vadd.f32 %v397, 1.0
        %v405 = vadd.f32 %v399, 1.0
        %v406 = vadd.f32 %v401, 1.0
        %v407 = vadd.f32 %v403, 1.0
        %v408 = vrcp.pop %v404
        %v409 = vmul.f32 1.0, %v408
        %v410 = vrcp.pop %v405
        %v411 = vmul.f32 1.0, %v410
        %v412 = vrcp.pop %v406
        %v413 = vmul.f32 1.0, %v412
        %v414 = vrcp.pop %v407
        %v415 = vmul.f32 1.0, %v414
        %v416 = vld [vmem:[%s3] sm:$0xff]
        %v417 = vld [vmem:[%s3 + $0x8] sm:$0xff]
        %v418 = vld [vmem:[%s3 + $0x10] sm:$0xff]
        %v419 = vld [vmem:[%s3 + $0x18] sm:$0xff]
        %421 = vset.pattern.permute.xlu0 0
        %422 = vperm.xlu0 %421, %v416
        %v423 = vpop.permute.xlu0 %422
        %426 = vset.pattern.permute.xlu0 0
        %427 = vperm.xlu0 %426, %v417
        %v428 = vpop.permute.xlu0 %427
        %431 = vset.pattern.permute.xlu0 0
        %432 = vperm.xlu0 %431, %v418
        %v433 = vpop.permute.xlu0 %432
        %436 = vset.pattern.permute.xlu0 0
        %437 = vperm.xlu0 %436, %v419
        %v438 = vpop.permute.xlu0 %437
        %v440 = vmul.f32 %v409, %v423
        %v441 = vmul.f32 %v411, %v428
        %v442 = vmul.f32 %v413, %v433
        %v443 = vmul.f32 %v415, %v438
        %v444 = vadd.f32 %v440, %v441
        %v445 = vadd.f32 %v444, %v442
        %v446 = vadd.f32 %v445, %v443
        %v447 = vrot.slane %v446, 4
        %v448 = vadd.f32 %v446, %v447
        %v449 = vrot.slane %v448, 2
        %v450 = vadd.f32 %v448, %v449
        %v451 = vrot.slane %v450, 1
        %v452 = vadd.f32 %v450, %v451
        %s453 = sld [smem:[#allocation2]]
        %v454 = vstv %s453
        %v455 = vadd.f32 %v452, %v454
        %v456 = vxor.u32 %v455, 2147483648
        %v457 = vmul.f32 %v456, 1.442695
        %v458 = vpow.pop %v457
        %v459 = vadd.f32 %v458, 1.0
        %v460 = vrcp.pop %v459
        %v461 = vmul.f32 1.0, %v460
        %462 = vst [vmem:[%s252] sm:$0x1] %v461
        %s463 = sand.u32 %s159, 1
        %s464 = scalar_lea.sflag [#allocation4], %s463
        %s465 = sand.u32 %s159, 1
        %s466 = scalar_lea.vmem [#allocation3], %s465
        // Predicated region
        $region41: #{tpu_custom_call.1} parent=39 // pred_check
          %p467 = pneg %p169
        $region42: #{tpu_custom_call.1} parent=39 // pred_check_branch
          %469 = sbr.rel (%p467) target = $region44
        $region43: #{tpu_custom_call.1} parent=39 // pred_region
          %s471 = ssub.s32 16, 16
          %472 = vsyncadd %s464, %s471
          %s473 = sadd.s32 %s25, %s24
          %s474 = smul.addr %s473, 16
          %s475 = scalar_lea.hbm %s5, %s474
          %s477 = sshll.u32 %s466, 4
          %s478 = int_to_ptr.vmem [resolvable:$true] %s477
          %480 = dma.vmem_to_hbm [thread:$0]  %s478, 16, %s475, %s464
        $region44: #{tpu_custom_call.1} parent=39 // pred_fallthru
          _
      $region40: #{tpu_custom_call.1} parent=5 // pred_fallthru
        _
      %p481 = scmp.le.s32.totalorder 2, %s15
      // Predicated region
      $region45: #{tpu_custom_call.1} parent=5 // pred_check
        %p482 = pneg %p481
      $region46: #{tpu_custom_call.1} parent=5 // pred_check_branch
        %484 = sbr.rel (%p482) target = $region48
      $region47: #{tpu_custom_call.1} parent=5 // pred_region
        %s485 = ssub.s32 %s15, 2
        // Predicated region
        $region49: #{tpu_custom_call.1} parent=47 // pred_check
          %p486 = pneg %p175
        $region50: #{tpu_custom_call.1} parent=47 // pred_check_branch
          %488 = sbr.rel (%p486) target = $region52
        $region51: #{tpu_custom_call.1} parent=47 // pred_region
          %s489 = sand.u32 %s160, 1
          %s490 = scalar_lea.sflag [#allocation4], %s489
          %s491 = sand.u32 %s160, 1
          %s492 = scalar_lea.vmem [#allocation3], %s491
          %493 = dma.done %s490, 16
        $region52: #{tpu_custom_call.1} parent=47 // pred_fallthru
          _
      $region48: #{tpu_custom_call.1} parent=5 // pred_fallthru
        _
    $region6: #{tpu_custom_call.1} parent=1 // loop_footer
      %s19 = sadd.s32 1, %s15
    $region7: #{tpu_custom_call.1} parent=1 // loop_footer_branch
      %14 = sbr.rel target = $region3
    $region8: #{tpu_custom_call.1} parent=1 // loop_exit
      _
    %494 = vsyncpa [#allocation4], 1
    %s495 = scalar_lea.sflag [#allocation4], 1
    %496 = vsyncpa %s495, 1

</llo_original>
